<compile_context>
chip_gen: v5e
topology: v5e:2x2
jax: 0.10.0
libtpu: 0.0.40
codegen_flags: <defaults>
</compile_context>

<pallas_src>
import functools

import jax
import jax.numpy as jnp
from jax.experimental import pallas as pl
from jax.experimental.pallas import tpu as pltpu


def _make_distilled_kernel(num_actions, n_chunks, rows_per_chunk):
    """Build the kernel with static chunking parameters baked in."""

    def kernel(x_ref,
               w1_ref, b1_ref,
               w2_ref, b2_ref,
               w3_ref, b3_ref,
               w4_ref, b4_ref,
               out_ref):
        # Weights are small and VMEM-resident (constant block index) -- load once.
        w1, b1 = w1_ref[...], b1_ref[...]
        w2, b2 = w2_ref[...], b2_ref[...]
        w3, b3 = w3_ref[...], b3_ref[...]
        w4, b4 = w4_ref[...], b4_ref[...]

        # Split the batch tile into independent sub-chunks and trace each layer
        # for all chunks before the next layer, so the MXU has independent work
        # to overlap with the result-pop / ReLU of the previous chunk.
        xs = [x_ref[pl.ds(c * rows_per_chunk, rows_per_chunk), :]
              for c in range(n_chunks)]

        h = [jnp.maximum(
                jnp.dot(xc, w1, preferred_element_type=jnp.float32) + b1, 0.0)
             for xc in xs]
        h = [jnp.maximum(
                jnp.dot(hc, w2, preferred_element_type=jnp.float32) + b2, 0.0)
             for hc in h]
        h = [jnp.maximum(
                jnp.dot(hc, w3, preferred_element_type=jnp.float32) + b3, 0.0)
             for hc in h]
        logits = [jnp.dot(hc, w4, preferred_element_type=jnp.float32) + b4
                  for hc in h]

        # Softmax epilogue + packed store: [scores | logits] on the lane axis.
        for c in range(n_chunks):
            lg = logits[c]
            m = jnp.max(lg, axis=-1, keepdims=True)
            e = jnp.exp(lg - m)
            denom = jnp.sum(e, axis=-1, keepdims=True)
            scores = e * pl.reciprocal(denom, approx=False)
            packed = jnp.concatenate([scores, lg], axis=-1)
            out_ref[pl.ds(c * rows_per_chunk, rows_per_chunk), :] = (
                packed.astype(out_ref.dtype))

    return kernel


def _default_batch_tile(B):
    """Largest sublane-aligned tile <= 1024 that still yields >= 2 grid steps
    (so v7x can shard the batch axis across its 2 TensorCores); otherwise the
    largest tile that divides B; otherwise the whole batch."""
    candidates = (1024, 512, 256, 128, 64, 32, 16, 8)
    for cand in candidates:
        if B % cand == 0 and B // cand >= 2:
            return cand
    for cand in candidates:
        if B % cand == 0:
            return cand
    return B


def distilled_forward(x, params, *, batch_tile=None):
    """Run the Distilled forward pass in a Pallas kernel.

    x: (B, input_size) float32
    params: dict with w1..w4 (in, out) and b1..b4 (1, out)
    returns (action_scores, action_pref), each (B, num_actions)
    """
    B, in_size = x.shape
    num_actions = params["w4"].shape[1]

    if batch_tile is None:
        batch_tile = _default_batch_tile(B)
    assert B % batch_tile == 0, "batch_tile must divide B"
    # If we sub-tile the batch, the tile must be sublane-aligned (8 rows).
    assert batch_tile == B or batch_tile % 8 == 0, \
        "batch_tile must be a multiple of 8 (or equal to B)"

    # Interleave two independent sub-chunks inside a tile when it is large
    # enough; each chunk must itself be sublane-aligned.
    n_chunks = 2 if (batch_tile % 16 == 0) else 1
    rows_per_chunk = batch_tile // n_chunks

    grid = (B // batch_tile,)

    x_spec = pl.BlockSpec((batch_tile, in_size), lambda i: (i, 0))
    # Constant block index -> Pallas keeps weights resident across grid steps.
    weight_specs = [
        pl.BlockSpec(params[k].shape, lambda i: (0, 0))
        for k in ("w1", "b1", "w2", "b2", "w3", "b3", "w4", "b4")
    ]
    out_spec = pl.BlockSpec((batch_tile, 2 * num_actions), lambda i: (i, 0))

    kernel = _make_distilled_kernel(num_actions, n_chunks, rows_per_chunk)

    packed = pl.pallas_call(
        kernel,
        grid=grid,
        in_specs=[x_spec] + weight_specs,
        out_specs=out_spec,
        out_shape=jax.ShapeDtypeStruct((B, 2 * num_actions), jnp.float32),
        compiler_params=pltpu.CompilerParams(
            dimension_semantics=("parallel",)),
    )(x, params["w1"], params["b1"], params["w2"], params["b2"],
      params["w3"], params["b3"], params["w4"], params["b4"])

    action_scores = packed[:, :num_actions]
    action_pref = packed[:, num_actions:]
    return action_scores, action_pref


def init_params(key, input_size, num_actions):
    """Deterministic synthetic parameter init (Kaiming-uniform-ish like torch)."""
    dims = [(input_size, 64), (64, 128), (128, 64), (64, num_actions)]
    params = {}
    for idx, (fan_in, fan_out) in enumerate(dims, start=1):
        key, kw, kb = jax.random.split(key, 3)
        bound = 1.0 / jnp.sqrt(fan_in)
        params[f"w{idx}"] = jax.random.uniform(
            kw, (fan_in, fan_out), jnp.float32, -bound, bound)
        params[f"b{idx}"] = jax.random.uniform(
            kb, (1, fan_out), jnp.float32, -bound, bound)
    return params


def _reference(x, params):
    h = jnp.maximum(x @ params["w1"] + params["b1"], 0.0)
    h = jnp.maximum(h @ params["w2"] + params["b2"], 0.0)
    h = jnp.maximum(h @ params["w3"] + params["b3"], 0.0)
    logits = h @ params["w4"] + params["b4"]
    return jax.nn.softmax(logits, axis=-1), logits


if __name__ == "__main__":
    key = jax.random.PRNGKey(0)
    key, kx_small, kx_big, kp = jax.random.split(key, 4)

    input_size = 32
    num_actions = 16
    num_tasks = 3  # only used for bookkeeping lists in the torch module; no compute
    params = init_params(kp, input_size, num_actions)

    # Small demo shape (matches the module's typical RL usage).
    batch_small = 8
    x_small = jax.random.normal(kx_small, (batch_small, input_size), jnp.float32)
    scores, pref = distilled_forward(x_small, params)
    scores = jax.block_until_ready(scores)
    pref = jax.block_until_ready(pref)
    ref_scores, ref_pref = _reference(x_small, params)
    assert scores.shape == (batch_small, num_actions)
    assert pref.shape == (batch_small, num_actions)
    assert jnp.allclose(scores, ref_scores, atol=1e-5, rtol=1e-5)
    assert jnp.allclose(pref, ref_pref, atol=1e-5, rtol=1e-5)

    # Larger batch to exercise multi-step grid (pipelining / v7x dual-TC path)
    # and the 2-way sub-chunk interleave inside each tile.
    batch_big = 256
    x_big = jax.random.normal(kx_big, (batch_big, input_size), jnp.float32)
    scores_b, pref_b = distilled_forward(x_big, params)
    scores_b = jax.block_until_ready(scores_b)
    pref_b = jax.block_until_ready(pref_b)
    ref_scores_b, ref_pref_b = _reference(x_big, params)
    assert scores_b.shape == (batch_big, num_actions)
    assert pref_b.shape == (batch_big, num_actions)
    assert jnp.allclose(scores_b, ref_scores_b, atol=1e-5, rtol=1e-5)
    assert jnp.allclose(pref_b, ref_pref_b, atol=1e-5, rtol=1e-5)

    print("KERNEL_OK")
</pallas_src>

<mosaic_0001>
module attributes {stable_mosaic.version = 11 : i64} {
  func.func @kernel(%arg0: i32, %arg1: memref<8x32xf32, #tpu.memory_space<vmem>>, %arg2: memref<32x64xf32, #tpu.memory_space<vmem>>, %arg3: memref<1x64xf32, #tpu.memory_space<vmem>>, %arg4: memref<64x128xf32, #tpu.memory_space<vmem>>, %arg5: memref<1x128xf32, #tpu.memory_space<vmem>>, %arg6: memref<128x64xf32, #tpu.memory_space<vmem>>, %arg7: memref<1x64xf32, #tpu.memory_space<vmem>>, %arg8: memref<64x16xf32, #tpu.memory_space<vmem>>, %arg9: memref<1x16xf32, #tpu.memory_space<vmem>>, %arg10: memref<8x32xf32, #tpu.memory_space<vmem>>) attributes {dimension_semantics = [#tpu.dimension_semantics<parallel>], iteration_bounds = array<i64: 1>, scalar_prefetch = 0 : i64, scratch_operands = 0 : i64, tpu.core_type = #tpu.core_type<tc>, window_params = [{transform_indices = @transform_0, window_bounds = array<i64: 8, 32>}, {pipeline_mode = #tpu.pipeline_mode<synchronous>, transform_indices = @transform_1, window_bounds = array<i64: 32, 64>}, {pipeline_mode = #tpu.pipeline_mode<synchronous>, transform_indices = @transform_2, window_bounds = array<i64: 1, 64>}, {pipeline_mode = #tpu.pipeline_mode<synchronous>, transform_indices = @transform_3, window_bounds = array<i64: 64, 128>}, {pipeline_mode = #tpu.pipeline_mode<synchronous>, transform_indices = @transform_4, window_bounds = array<i64: 1, 128>}, {pipeline_mode = #tpu.pipeline_mode<synchronous>, transform_indices = @transform_5, window_bounds = array<i64: 128, 64>}, {pipeline_mode = #tpu.pipeline_mode<synchronous>, transform_indices = @transform_6, window_bounds = array<i64: 1, 64>}, {pipeline_mode = #tpu.pipeline_mode<synchronous>, transform_indices = @transform_7, window_bounds = array<i64: 64, 16>}, {pipeline_mode = #tpu.pipeline_mode<synchronous>, transform_indices = @transform_8, window_bounds = array<i64: 1, 16>}, {transform_indices = @transform_9, window_bounds = array<i64: 8, 32>}]} {
    %c0 = arith.constant 0 : index
    %c0_0 = arith.constant 0 : index
    %0 = vector.load %arg2[%c0, %c0_0] : memref<32x64xf32, #tpu.memory_space<vmem>>, vector<32x64xf32>
    %c0_1 = arith.constant 0 : index
    %c0_2 = arith.constant 0 : index
    %1 = vector.load %arg3[%c0_1, %c0_2] : memref<1x64xf32, #tpu.memory_space<vmem>>, vector<1x64xf32>
    %c0_3 = arith.constant 0 : index
    %c0_4 = arith.constant 0 : index
    %2 = vector.load %arg4[%c0_3, %c0_4] : memref<64x128xf32, #tpu.memory_space<vmem>>, vector<64x128xf32>
    %c0_5 = arith.constant 0 : index
    %c0_6 = arith.constant 0 : index
    %3 = vector.load %arg5[%c0_5, %c0_6] : memref<1x128xf32, #tpu.memory_space<vmem>>, vector<1x128xf32>
    %c0_7 = arith.constant 0 : index
    %c0_8 = arith.constant 0 : index
    %4 = vector.load %arg6[%c0_7, %c0_8] : memref<128x64xf32, #tpu.memory_space<vmem>>, vector<128x64xf32>
    %c0_9 = arith.constant 0 : index
    %c0_10 = arith.constant 0 : index
    %5 = vector.load %arg7[%c0_9, %c0_10] : memref<1x64xf32, #tpu.memory_space<vmem>>, vector<1x64xf32>
    %c0_11 = arith.constant 0 : index
    %c0_12 = arith.constant 0 : index
    %6 = vector.load %arg8[%c0_11, %c0_12] : memref<64x16xf32, #tpu.memory_space<vmem>>, vector<64x16xf32>
    %c0_13 = arith.constant 0 : index
    %c0_14 = arith.constant 0 : index
    %7 = vector.load %arg9[%c0_13, %c0_14] : memref<1x16xf32, #tpu.memory_space<vmem>>, vector<1x16xf32>
    %c0_15 = arith.constant 0 : index
    %c0_16 = arith.constant 0 : index
    %8 = vector.load %arg1[%c0_15, %c0_16] : memref<8x32xf32, #tpu.memory_space<vmem>>, vector<8x32xf32>
    %cst = arith.constant dense<0.000000e+00> : vector<8x64xf32>
    %9 = tpu.matmul %8, %0, %cst {dimension_numbers = #tpu.dot_dimension_numbers<[1], [0], [0], [1], [0, 0, 1, 1], [], []>} : vector<8x32xf32>, vector<32x64xf32>, vector<8x64xf32> -> vector<8x64xf32>
    %10 = vector.broadcast %1 : vector<1x64xf32> to vector<8x64xf32>
    %11 = arith.addf %9, %10 : vector<8x64xf32>
    %cst_17 = arith.constant 0.000000e+00 : f32
    %12 = vector.broadcast %cst_17 : f32 to vector<8x64xf32>
    %13 = arith.maximumf %11, %12 : vector<8x64xf32>
    %cst_18 = arith.constant dense<0.000000e+00> : vector<8x128xf32>
    %14 = tpu.matmul %13, %2, %cst_18 {dimension_numbers = #tpu.dot_dimension_numbers<[1], [0], [0], [1], [0, 0, 1, 1], [], []>} : vector<8x64xf32>, vector<64x128xf32>, vector<8x128xf32> -> vector<8x128xf32>
    %15 = vector.broadcast %3 : vector<1x128xf32> to vector<8x128xf32>
    %16 = arith.addf %14, %15 : vector<8x128xf32>
    %cst_19 = arith.constant 0.000000e+00 : f32
    %17 = vector.broadcast %cst_19 : f32 to vector<8x128xf32>
    %18 = arith.maximumf %16, %17 : vector<8x128xf32>
    %cst_20 = arith.constant dense<0.000000e+00> : vector<8x64xf32>
    %19 = tpu.matmul %18, %4, %cst_20 {dimension_numbers = #tpu.dot_dimension_numbers<[1], [0], [0], [1], [0, 0, 1, 1], [], []>} : vector<8x128xf32>, vector<128x64xf32>, vector<8x64xf32> -> vector<8x64xf32>
    %20 = vector.broadcast %5 : vector<1x64xf32> to vector<8x64xf32>
    %21 = arith.addf %19, %20 : vector<8x64xf32>
    %cst_21 = arith.constant 0.000000e+00 : f32
    %22 = vector.broadcast %cst_21 : f32 to vector<8x64xf32>
    %23 = arith.maximumf %21, %22 : vector<8x64xf32>
    %cst_22 = arith.constant dense<0.000000e+00> : vector<8x16xf32>
    %24 = tpu.matmul %23, %6, %cst_22 {dimension_numbers = #tpu.dot_dimension_numbers<[1], [0], [0], [1], [0, 0, 1, 1], [], []>} : vector<8x64xf32>, vector<64x16xf32>, vector<8x16xf32> -> vector<8x16xf32>
    %25 = vector.broadcast %7 : vector<1x16xf32> to vector<8x16xf32>
    %26 = arith.addf %24, %25 : vector<8x16xf32>
    %cst_23 = arith.constant dense<0xFF800000> : vector<8xf32>
    %27 = vector.multi_reduction <maximumf>, %26, %cst_23 [1] : vector<8x16xf32> to vector<8xf32>
    %28 = vector.shape_cast %27 : vector<8xf32> to vector<8x1xf32>
    %29 = vector.broadcast %28 : vector<8x1xf32> to vector<8x16xf32>
    %30 = arith.subf %26, %29 : vector<8x16xf32>
    %31 = math.exp %30 : vector<8x16xf32>
    %cst_24 = arith.constant dense<0.000000e+00> : vector<8xf32>
    %32 = vector.multi_reduction <add>, %31, %cst_24 [1] : vector<8x16xf32> to vector<8xf32>
    %33 = vector.shape_cast %32 : vector<8xf32> to vector<8x1xf32>
    %34 = tpu.reciprocal %33 : vector<8x1xf32> -> vector<8x1xf32>
    %35 = vector.broadcast %34 : vector<8x1xf32> to vector<8x16xf32>
    %36 = arith.mulf %31, %35 : vector<8x16xf32>
    %37 = tpu.concatenate %36, %26 in 1 : vector<8x16xf32>, vector<8x16xf32> -> vector<8x32xf32>
    %c0_25 = arith.constant 0 : index
    %c0_26 = arith.constant 0 : index
    %38 = vector.load %arg10[%c0_25, %c0_26] : memref<8x32xf32, #tpu.memory_space<vmem>>, vector<8x32xf32>
    tpu.vector_store %arg10[%c0_25, %c0_26], %37 {strides = array<i32>} : memref<8x32xf32, #tpu.memory_space<vmem>>, vector<8x32xf32>,
    return
  }
  func.func @transform_0(%arg0: i32) -> (i32, i32) {
    %c0_i32 = arith.constant 0 : i32
    %c0_i32_0 = arith.constant 0 : i32
    return %arg0, %c0_i32 : i32, i32
  }
  func.func @transform_1(%arg0: i32) -> (i32, i32) {
    %c0_i32 = arith.constant 0 : i32
    %c0_i32_0 = arith.constant 0 : i32
    %c0_i32_1 = arith.constant 0 : i32
    return %c0_i32, %c0_i32_0 : i32, i32
  }
  func.func @transform_2(%arg0: i32) -> (i32, i32) {
    %c0_i32 = arith.constant 0 : i32
    %c0_i32_0 = arith.constant 0 : i32
    %c0_i32_1 = arith.constant 0 : i32
    return %c0_i32, %c0_i32_0 : i32, i32
  }
  func.func @transform_3(%arg0: i32) -> (i32, i32) {
    %c0_i32 = arith.constant 0 : i32
    %c0_i32_0 = arith.constant 0 : i32
    %c0_i32_1 = arith.constant 0 : i32
    return %c0_i32, %c0_i32_0 : i32, i32
  }
  func.func @transform_4(%arg0: i32) -> (i32, i32) {
    %c0_i32 = arith.constant 0 : i32
    %c0_i32_0 = arith.constant 0 : i32
    %c0_i32_1 = arith.constant 0 : i32
    return %c0_i32, %c0_i32_0 : i32, i32
  }
  func.func @transform_5(%arg0: i32) -> (i32, i32) {
    %c0_i32 = arith.constant 0 : i32
    %c0_i32_0 = arith.constant 0 : i32
    %c0_i32_1 = arith.constant 0 : i32
    return %c0_i32, %c0_i32_0 : i32, i32
  }
  func.func @transform_6(%arg0: i32) -> (i32, i32) {
    %c0_i32 = arith.constant 0 : i32
    %c0_i32_0 = arith.constant 0 : i32
    %c0_i32_1 = arith.constant 0 : i32
    return %c0_i32, %c0_i32_0 : i32, i32
  }
  func.func @transform_7(%arg0: i32) -> (i32, i32) {
    %c0_i32 = arith.constant 0 : i32
    %c0_i32_0 = arith.constant 0 : i32
    %c0_i32_1 = arith.constant 0 : i32
    return %c0_i32, %c0_i32_0 : i32, i32
  }
  func.func @transform_8(%arg0: i32) -> (i32, i32) {
    %c0_i32 = arith.constant 0 : i32
    %c0_i32_0 = arith.constant 0 : i32
    %c0_i32_1 = arith.constant 0 : i32
    return %c0_i32, %c0_i32_0 : i32, i32
  }
  func.func @transform_9(%arg0: i32) -> (i32, i32) {
    %c0_i32 = arith.constant 0 : i32
    %c0_i32_0 = arith.constant 0 : i32
    return %arg0, %c0_i32 : i32, i32
  }
}

</mosaic_0001>

<llo_original>
// kernel: tpu_custom_call.1
$region0: #{tpu_custom_call.1}
  #allocation0 [shape = 'u32[]', space=smem, size = 0x4, offset = 0x4, fixed_abs, tag = 'smem constant byte address 0x4 - core index']
  #allocation1 [shape = 'u32[72,128]{1,0:T(1,128)}', space=vmem, size = 0x9000, scoped, tag = 'internal scratch']
  %s0 = inlined_call_operand.vmem [shape: f32[8,32], index: 0, kind: input, shape index: {}]
  %s1 = inlined_call_operand.vmem [shape: f32[32,64], index: 1, kind: input, shape index: {}]
  %s2 = inlined_call_operand.vmem [shape: f32[1,64], index: 2, kind: input, shape index: {}]
  %s3 = inlined_call_operand.vmem [shape: f32[64,128], index: 3, kind: input, shape index: {}]
  %s4 = inlined_call_operand.vmem [shape: f32[1,128], index: 4, kind: input, shape index: {}]
  %s5 = inlined_call_operand.vmem [shape: f32[128,64], index: 5, kind: input, shape index: {}]
  %s6 = inlined_call_operand.vmem [shape: f32[1,64], index: 6, kind: input, shape index: {}]
  %s7 = inlined_call_operand.vmem [shape: f32[64,16], index: 7, kind: input, shape index: {}]
  %s8 = inlined_call_operand.vmem [shape: f32[1,16], index: 8, kind: input, shape index: {}]
  %s9 = inlined_call_operand.hbm [shape: f32[8,32], index: 9, kind: output, shape index: {}]
  %s10 = sld [smem:[#allocation0]]
  $region46: #{tpu_custom_call.1} parent=0
    _
  %s12 = ssub.s32 1, %s10
  %s13 = scalar_select 0, %s12, %s10
  $region1: #{tpu_custom_call.1} parent=0
    #allocation2 [shape = 'u8[4096]{0}', space=vmem, size = 0x1000, scoped, tag = 'output window, operand 0, single buffered']
    #allocation3 [shape = 's32[1]{0}', space=sflag, size = 0x4, scoped, tag = 'scoped memory for tpu_custom_call.1']
    %14 = vsyncpa [#allocation3], 0
    // Predicated region
    $region2: #{tpu_custom_call.1} parent=1 // pred_check
      _
    $region3: #{tpu_custom_call.1} parent=1 // pred_check_branch
      %16 = sbr.rel (0) target = $region5
    $region4: #{tpu_custom_call.1} parent=1 // pred_region
      _
    $region5: #{tpu_custom_call.1} parent=1 // pred_fallthru
      _
    // Predicated region
    $region6: #{tpu_custom_call.1} parent=1 // pred_check
      _
    $region7: #{tpu_custom_call.1} parent=1 // pred_check_branch
      %18 = sbr.rel (0) target = $region9
    $region8: #{tpu_custom_call.1} parent=1 // pred_region
      _
    $region9: #{tpu_custom_call.1} parent=1 // pred_fallthru
      _
    // Predicated region
    $region10: #{tpu_custom_call.1} parent=1 // pred_check
      _
    $region11: #{tpu_custom_call.1} parent=1 // pred_check_branch
      %20 = sbr.rel (0) target = $region13
    $region12: #{tpu_custom_call.1} parent=1 // pred_region
      _
    $region13: #{tpu_custom_call.1} parent=1 // pred_fallthru
      _
    // Predicated region
    $region14: #{tpu_custom_call.1} parent=1 // pred_check
      _
    $region15: #{tpu_custom_call.1} parent=1 // pred_check_branch
      %22 = sbr.rel (0) target = $region17
    $region16: #{tpu_custom_call.1} parent=1 // pred_region
      _
    $region17: #{tpu_custom_call.1} parent=1 // pred_fallthru
      _
    // Predicated region
    $region18: #{tpu_custom_call.1} parent=1 // pred_check
      _
    $region19: #{tpu_custom_call.1} parent=1 // pred_check_branch
      %24 = sbr.rel (0) target = $region21
    $region20: #{tpu_custom_call.1} parent=1 // pred_region
      _
    $region21: #{tpu_custom_call.1} parent=1 // pred_fallthru
      _
    // Predicated region
    $region22: #{tpu_custom_call.1} parent=1 // pred_check
      _
    $region23: #{tpu_custom_call.1} parent=1 // pred_check_branch
      %26 = sbr.rel (0) target = $region25
    $region24: #{tpu_custom_call.1} parent=1 // pred_region
      _
    $region25: #{tpu_custom_call.1} parent=1 // pred_fallthru
      _
    // Predicated region
    $region26: #{tpu_custom_call.1} parent=1 // pred_check
      _
    $region27: #{tpu_custom_call.1} parent=1 // pred_check_branch
      %28 = sbr.rel (0) target = $region29
    $region28: #{tpu_custom_call.1} parent=1 // pred_region
      _
    $region29: #{tpu_custom_call.1} parent=1 // pred_fallthru
      _
    // Predicated region
    $region30: #{tpu_custom_call.1} parent=1 // pred_check
      _
    $region31: #{tpu_custom_call.1} parent=1 // pred_check_branch
      %30 = sbr.rel (0) target = $region33
    $region32: #{tpu_custom_call.1} parent=1 // pred_region
      _
    $region33: #{tpu_custom_call.1} parent=1 // pred_fallthru
      _
    // Predicated region
    $region34: #{tpu_custom_call.1} parent=1 // pred_check
      _
    $region35: #{tpu_custom_call.1} parent=1 // pred_check_branch
      %32 = sbr.rel (0) target = $region37
    $region36: #{tpu_custom_call.1} parent=1 // pred_region
      _
    $region37: #{tpu_custom_call.1} parent=1 // pred_fallthru
      _
    %v33 = vld [vmem:[%s1] sm:$0xff]
    %v34 = vld [vmem:[%s1 + $0x8] sm:$0xff]
    %v35 = vld [vmem:[%s1 + $0x10] sm:$0xff]
    %v36 = vld [vmem:[%s1 + $0x18] sm:$0xff]
    %v37 = vld [vmem:[%s2] sm:$0x1]
    %v38 = vld [vmem:[%s3] sm:$0xff]
    %v39 = vld [vmem:[%s3 + $0x8] sm:$0xff]
    %v40 = vld [vmem:[%s3 + $0x10] sm:$0xff]
    %v41 = vld [vmem:[%s3 + $0x18] sm:$0xff]
    %v42 = vld [vmem:[%s3 + $0x20] sm:$0xff]
    %v43 = vld [vmem:[%s3 + $0x28] sm:$0xff]
    %v44 = vld [vmem:[%s3 + $0x30] sm:$0xff]
    %v45 = vld [vmem:[%s3 + $0x38] sm:$0xff]
    %v46 = vld [vmem:[%s4] sm:$0x1]
    %v47 = vld [vmem:[%s5] sm:$0xff]
    %v48 = vld [vmem:[%s5 + $0x8] sm:$0xff]
    %v49 = vld [vmem:[%s5 + $0x10] sm:$0xff]
    %v50 = vld [vmem:[%s5 + $0x18] sm:$0xff]
    %v51 = vld [vmem:[%s5 + $0x20] sm:$0xff]
    %v52 = vld [vmem:[%s5 + $0x28] sm:$0xff]
    %v53 = vld [vmem:[%s5 + $0x30] sm:$0xff]
    %v54 = vld [vmem:[%s5 + $0x38] sm:$0xff]
    %v55 = vld [vmem:[%s5 + $0x40] sm:$0xff]
    %v56 = vld [vmem:[%s5 + $0x48] sm:$0xff]
    %v57 = vld [vmem:[%s5 + $0x50] sm:$0xff]
    %v58 = vld [vmem:[%s5 + $0x58] sm:$0xff]
    %v59 = vld [vmem:[%s5 + $0x60] sm:$0xff]
    %v60 = vld [vmem:[%s5 + $0x68] sm:$0xff]
    %v61 = vld [vmem:[%s5 + $0x70] sm:$0xff]
    %v62 = vld [vmem:[%s5 + $0x78] sm:$0xff]
    %v63 = vld [vmem:[%s6] sm:$0x1]
    %v64 = vld [vmem:[%s7] sm:$0xff]
    %v65 = vld [vmem:[%s7 + $0x8] sm:$0xff]
    %v66 = vld [vmem:[%s7 + $0x10] sm:$0xff]
    %v67 = vld [vmem:[%s7 + $0x18] sm:$0xff]
    %v68 = vld [vmem:[%s7 + $0x20] sm:$0xff]
    %v69 = vld [vmem:[%s7 + $0x28] sm:$0xff]
    %v70 = vld [vmem:[%s7 + $0x30] sm:$0xff]
    %v71 = vld [vmem:[%s7 + $0x38] sm:$0xff]
    %v72 = vld [vmem:[%s8] sm:$0x1]
    %v73 = vld [vmem:[%s0] sm:$0xff]
    %v75 = vperm.slane %v37, 0
    %vm77 = vcmask 261120
    %v79 = vsel %vm77, %v73, 0
    %81 = vmatpush.msra.mxu0 0.0
    %82 = vmatpush.msra.mxu0 0.0
    %83 = vmatpush.msra.mxu0 0.0
    %84 = vmatpush.msra.mxu0 0.0
    %85 = vmatpush.msra.mxu0 0.0
    %86 = vmatpush.msra.mxu0 0.0
    %87 = vmatpush.msra.mxu0 0.0
    %88 = vmatpush.msra.mxu0 0.0
    %89 = vmatpush.msra.mxu0 0.0
    %90 = vmatpush.msra.mxu0 0.0
    %91 = vmatpush.msra.mxu0 0.0
    %92 = vmatpush.msra.mxu0 0.0
    %93 = vmatpush.msra.mxu0 %v36
    %94 = vmatpush.msra.mxu0 %v35
    %95 = vmatpush.msra.mxu0 %v34
    %96 = vmatpush.msra.mxu0 %v33
    %97 = vmatmul.f32.gmra.mxu0 %v79
    %v98 = vpop.f32.mrf.mxu0
    %v99 = vadd.f32 %v75, %v98
    %100 = vdwg.mxu0
    %v101 = vmax.f32 %v99, 0.0
    %v103 = vperm.slane %v46, 0
    %vm105 = vcmask 523264
    %v107 = vsel %vm105, %v101, 0
    %109 = vmatpush.msra.mxu0 0.0
    %110 = vmatpush.msra.mxu0 0.0
    %111 = vmatpush.msra.mxu0 0.0
    %112 = vmatpush.msra.mxu0 0.0
    %113 = vmatpush.msra.mxu0 0.0
    %114 = vmatpush.msra.mxu0 0.0
    %115 = vmatpush.msra.mxu0 0.0
    %116 = vmatpush.msra.mxu0 0.0
    %117 = vmatpush.msra.mxu0 %v45
    %118 = vmatpush.msra.mxu0 %v44
    %119 = vmatpush.msra.mxu0 %v43
    %120 = vmatpush.msra.mxu0 %v42
    %121 = vmatpush.msra.mxu0 %v41
    %122 = vmatpush.msra.mxu0 %v40
    %123 = vmatpush.msra.mxu0 %v39
    %124 = vmatpush.msra.mxu0 %v38
    %125 = vmatmul.f32.gmra.mxu0 %v107
    %v126 = vpop.f32.mrf.mxu0
    %v127 = vadd.f32 %v103, %v126
    %128 = vdwg.mxu0
    %v129 = vmax.f32 %v127, 0.0
    %v131 = vperm.slane %v63, 0
    %133 = vmatpush.msra.mxu0 %v62
    %134 = vmatpush.msra.mxu0 %v61
    %135 = vmatpush.msra.mxu0 %v60
    %136 = vmatpush.msra.mxu0 %v59
    %137 = vmatpush.msra.mxu0 %v58
    %138 = vmatpush.msra.mxu0 %v57
    %139 = vmatpush.msra.mxu0 %v56
    %140 = vmatpush.msra.mxu0 %v55
    %141 = vmatpush.msra.mxu0 %v54
    %142 = vmatpush.msra.mxu0 %v53
    %143 = vmatpush.msra.mxu0 %v52
    %144 = vmatpush.msra.mxu0 %v51
    %145 = vmatpush.msra.mxu0 %v50
    %146 = vmatpush.msra.mxu0 %v49
    %147 = vmatpush.msra.mxu0 %v48
    %148 = vmatpush.msra.mxu0 %v47
    %149 = vmatmul.f32.gmra.mxu0 %v129
    %v150 = vpop.f32.mrf.mxu0
    %v151 = vadd.f32 %v131, %v150
    %152 = vdwg.mxu0
    %v153 = vmax.f32 %v151, 0.0
    %v155 = vperm.slane %v72, 0
    %v158 = vsel %vm105, %v153, 0
    %160 = vmatpush.msra.mxu0 0.0
    %161 = vmatpush.msra.mxu0 0.0
    %162 = vmatpush.msra.mxu0 0.0
    %163 = vmatpush.msra.mxu0 0.0
    %164 = vmatpush.msra.mxu0 0.0
    %165 = vmatpush.msra.mxu0 0.0
    %166 = vmatpush.msra.mxu0 0.0
    %167 = vmatpush.msra.mxu0 0.0
    %168 = vmatpush.msra.mxu0 %v71
    %169 = vmatpush.msra.mxu0 %v70
    %170 = vmatpush.msra.mxu0 %v69
    %171 = vmatpush.msra.mxu0 %v68
    %172 = vmatpush.msra.mxu0 %v67
    %173 = vmatpush.msra.mxu0 %v66
    %174 = vmatpush.msra.mxu0 %v65
    %175 = vmatpush.msra.mxu0 %v64
    %176 = vmatmul.f32.gmra.mxu0 %v158
    %v177 = vpop.f32.mrf.mxu0
    %v178 = vadd.f32 %v155, %v177
    %179 = vdwg.mxu0
    %vm180 = vcmask 130048
    %v181 = vsel %vm180, %v178, -inf
    %182 = vmax.xlane.f32.xlu0 %v181
    %v183 = vpop.xlane.xlu0 %182
    %v184 = vsub.f32 %v178, %v183
    %v185 = vmul.f32 %v184, 1.442695
    %v186 = vpow.pop %v185
    %v187 = vsel %vm180, %v186, 0.0
    %188 = vadd.xlane.f32.xlu0 %v187
    %v189 = vpop.xlane.xlu0 %188
    %v190 = vrcp.pop %v189
    %v191 = vmul.f32 %v189, %v190
    %v192 = vsub.f32 1.0, %v191
    %v193 = vmul.f32 %v190, %v192
    %v194 = vadd.f32 %v190, %v193
    %vm195 = vweird.f32 %v189
    %vm196 = vweird.f32 %v190
    %vm197 = vmor %vm195, %vm196
    %v198 = vsel %vm197, %v190, %v194
    %v199 = vand.u32 2147483647, %v189
    %vm200 = vcmp.eq.f32.partialorder %v199, 8.507059e+37
    %v201 = vand.u32 %v189, 2147483648
    %v202 = vor.u32 1.1754944e-38, %v201
    %v203 = vsel %vm200, %v202, %v198
    %v204 = vmul.f32 %v186, %v203
    %206 = vrot.lane.b32.xlu0 %v178, 16
    %v207 = vpop.permute.xlu0 %206
    %v209 = vsel %vm180, %v204, %v207
    %210 = vst.msk [vmem:[#allocation2] sm:$0xff] %vm77, %v209
    // Predicated region
    $region38: #{tpu_custom_call.1} parent=1 // pred_check
      _
    $region39: #{tpu_custom_call.1} parent=1 // pred_check_branch
      %212 = sbr.rel (0) target = $region41
    $region40: #{tpu_custom_call.1} parent=1 // pred_region
      %214 = vsyncadd [#allocation3], 0
      %s216 = sshll.u32 [#allocation2], 4
      %s217 = int_to_ptr.vmem [resolvable:$true] %s216
      %s218 = sshll.u32 %s9, 4
      %s219 = int_to_ptr.hbm [resolvable:$true] %s218
      %221 = dma.vmem_to_hbm [thread:$0]  %s217, 128, %s219, [#allocation3]
    $region41: #{tpu_custom_call.1} parent=1 // pred_fallthru
      _
    // Predicated region
    $region42: #{tpu_custom_call.1} parent=1 // pred_check
      _
    $region43: #{tpu_custom_call.1} parent=1 // pred_check_branch
      %223 = sbr.rel (0) target = $region45
    $region44: #{tpu_custom_call.1} parent=1 // pred_region
      %225 = dma.done [#allocation3], 128
    $region45: #{tpu_custom_call.1} parent=1 // pred_fallthru
      _
    %226 = vsyncpa [#allocation3], 1

</llo_original>
